<compile_context>
chip_gen: v7x
topology: tpu7x:2x2x1
jax: 0.10.0
libtpu: 0.0.40
codegen_flags: <defaults>
</compile_context>

<pallas_src>
import functools
import numpy as np
import jax
import jax.numpy as jnp
from jax import lax
from jax.experimental import pallas as pl
from jax.experimental.pallas import tpu as pltpu


# ----------------------------- Pallas kernel ------------------------------ #
def _sprompts_kernel(x_ref, k_ref, k2_ref, ct_ref, p_ref, o_ref):
    # x_ref : (Bt, nL, D)       query slab for this batch tile (original layout)
    # k_ref : (nL, TK, D)       stacked keys (resident across batch tiles)
    # k2_ref: (nL, TK)          precomputed ||k||^2 per key
    # ct_ref: (1, TK)           lane -> task map (j // n_keys), f32
    # p_ref : (nL, T, LpE_pad)  stacked prompts (resident across batch tiles)
    # o_ref : (nL, Bt, LpE_pad)
    nL = k_ref.shape[0]
    T = p_ref.shape[1]
    Bt = x_ref.shape[0]

    k2 = k2_ref[...]                                     # (nL, TK) f32
    ct = ct_ref[...]                                     # (1, TK)  f32
    tcol = lax.broadcasted_iota(jnp.int32, (Bt, T), 1).astype(jnp.float32)

    # Static unroll over the (small) layer axis: one grid step does all layers,
    # so per-step launch/DMA-setup overhead is paid once per batch tile.
    for l in range(nL):
        xl = x_ref[:, l, :].astype(jnp.float32)          # (Bt, D)
        kl = k_ref[l].astype(jnp.float32)                # (TK, D)

        # Squared distance up to the per-row constant ||x_b||^2 (argmin-invariant).
        qk = lax.dot_general(xl, kl, (((1,), (1,)), ((), ())),
                             preferred_element_type=jnp.float32)      # (Bt, TK)
        dl = k2[l:l + 1, :] - 2.0 * qk                                # (Bt, TK)

        # First flattened argmin // n_keys: among columns at the global min,
        # take the smallest task id (lane->task map is non-decreasing, so this
        # matches torch's first-occurrence tie semantics).
        gmin = jnp.min(dl, axis=1, keepdims=True)                     # (Bt, 1)
        cand = jnp.where(dl == gmin, ct, jnp.float32(T))              # (Bt, TK)
        task = jnp.min(cand, axis=1, keepdims=True)                   # (Bt, 1)

        # P_ = p[task] via one-hot matmul (weights exactly 0/1 -> exact row copy).
        pl_tile = p_ref[l]                                            # (T, LpE_pad)
        onehot = (tcol == task).astype(pl_tile.dtype)                 # (Bt, T)
        out_l = lax.dot_general(onehot, pl_tile, (((1,), (0,)), ((), ())),
                                preferred_element_type=jnp.float32)   # (Bt, LpE_pad)
        o_ref[l] = out_l.astype(o_ref.dtype)


def _pick_batch_tile(B, nL, D, T, TK, LpE_pad, itemsize=4,
                     budget_bytes=12 * 1024 * 1024):
    """Choose Bt so the (double-buffered) working set fits v5e's default scoped
    VMEM (16 MiB) with headroom; also well under v7x's 64 MiB physical VMEM."""
    resident = 2 * (nL * TK * D + nL * T * LpE_pad + nL * TK + TK) * itemsize

    def step_bytes(bt):
        return 2 * (bt * nL * D + nL * bt * LpE_pad) * itemsize

    if resident + step_bytes(B) <= budget_bytes:
        return B
    for bt in (512, 256, 128, 64, 32, 16, 8):
        if bt < B and B % bt == 0 and resident + step_bytes(bt) <= budget_bytes:
            return bt
    return B  # fall back to a single big block; compiler may shrink pipelining


def sprompts_eval_pallas(x_query, K_used, P_used, K2, n_keys):
    """x_query: (B, nL, D); K_used: (nL, T, n_keys, D); P_used: (nL, T, Lp, E);
    K2: (nL, T*n_keys) precomputed ||k||^2.
    Returns (nL, B, Lp, E) == torch.stack(lp, dim=0) of the eval branch."""
    B, nL, D = x_query.shape
    _, T, nk, _ = K_used.shape
    _, _, Lp, E = P_used.shape
    assert nk == n_keys
    TK = T * n_keys
    LpE = Lp * E
    LpE_pad = ((LpE + 127) // 128) * 128      # lane-dense output stores

    Kf = K_used.reshape(nL, TK, D)
    Pf = P_used.reshape(nL, T, LpE)
    if LpE_pad != LpE:
        Pf = jnp.pad(Pf, ((0, 0), (0, 0), (0, LpE_pad - LpE)))

    # lane -> task map, f32 (values are small ints, exactly representable).
    col_task = jnp.asarray((np.arange(TK) // n_keys).astype(np.float32))[None, :]

    Bt = _pick_batch_tile(B, nL, D, T, TK, LpE_pad)
    grid = (B // Bt,) if (Bt < B and B % Bt == 0) else (1,)
    if grid == (1,):
        Bt = B

    flops = 2 * B * nL * TK * D + 2 * B * nL * T * LpE_pad
    bytes_accessed = 4 * (B * nL * D + nL * TK * D + nL * TK + TK
                          + nL * T * LpE_pad + nL * B * LpE_pad)

    out = pl.pallas_call(
        _sprompts_kernel,
        out_shape=jax.ShapeDtypeStruct((nL, B, LpE_pad), P_used.dtype),
        grid_spec=pl.GridSpec(
            grid=grid,
            in_specs=[
                # x stays in its original (B, nL, D) layout: no HBM transpose.
                pl.BlockSpec((Bt, nL, D), lambda b: (b, 0, 0)),
                # K / k2 / lane->task / P: constant block index -> resident.
                pl.BlockSpec((nL, TK, D), lambda b: (0, 0, 0)),
                pl.BlockSpec((nL, TK), lambda b: (0, 0)),
                pl.BlockSpec((1, TK), lambda b: (0, 0)),
                pl.BlockSpec((nL, T, LpE_pad), lambda b: (0, 0, 0)),
            ],
            out_specs=pl.BlockSpec((nL, Bt, LpE_pad), lambda b: (0, b, 0)),
        ),
        compiler_params=pltpu.CompilerParams(
            # Batch-tile axis is the parallel axis -> balanced split across the
            # two TensorCores on v7x (layer axis would load-imbalance).
            dimension_semantics=("parallel",)),
        cost_estimate=pl.CostEstimate(flops=flops, transcendentals=0,
                                      bytes_accessed=bytes_accessed),
    )(x_query, Kf, K2, col_task, Pf)

    if LpE_pad != LpE:
        out = out[..., :LpE]
    return out.reshape(nL, B, Lp, E)


# ------------------------------ module wrapper ----------------------------- #
class SPromptsJax:
    """JAX/Pallas re-implementation of SPrompts' forward math."""

    def __init__(self, emb_d, n_tasks, n_keys, task_keys, num_prompts, num_layers,
                 key_dim=768, seed=0):
        self.task_count = 0
        self.emb_d = emb_d
        self.key_d = key_dim
        self.n_tasks = n_tasks
        self.n_prompts = num_prompts
        self.n_keys = n_keys
        self.n_layers = num_layers

        key = jax.random.PRNGKey(seed)
        self.e_p = []   # per layer: (n_tasks, num_prompts, emb_d)
        self.e_k = []   # per layer: (n_tasks, n_keys, key_d) buffer
        for _ in range(num_layers):
            key, kp = jax.random.split(key)
            # tensor_prompt(..., ortho=False) -> nn.init.uniform_ in [0, 1)
            self.e_p.append(jax.random.uniform(
                kp, (n_tasks, num_prompts, emb_d), dtype=jnp.float32))
            self.e_k.append(jnp.zeros((n_tasks, n_keys, key_dim), jnp.float32))

        # TODO(synk): torch.load(keys_path) has no in-script equivalent; the
        # deterministic `task_keys` array passed in stands in for the loaded file.
        self.task_keys_temp = jnp.asarray(task_keys, dtype=jnp.float32)
        self.load_key = False
        self._cache = None   # (n_used, K_used, P_used, K2) — only rebuilt on key/task change

    def process_task_count(self, task_id):
        self.task_count = task_id
        self._cache = None

    def set_keys(self, layer, task, keys):
        # Helper mirroring key-buffer state accumulated across tasks (checkpoints).
        self.e_k[layer] = self.e_k[layer].at[task].set(jnp.asarray(keys, jnp.float32))
        self._cache = None

    def _stacked(self):
        n_used = self.task_count + 1
        if self._cache is not None and self._cache[0] == n_used:
            return self._cache[1], self._cache[2], self._cache[3]
        K_used = jnp.stack([k[:n_used] for k in self.e_k], axis=0)   # (nL, T, nk, D)
        P_used = jnp.stack([p[:n_used] for p in self.e_p], axis=0)   # (nL, T, Lp, E)
        nL = K_used.shape[0]
        # Precompute ||k||^2 once per key-slab change (perf review item #1).
        K2 = jnp.sum(K_used.astype(jnp.float32) ** 2, axis=-1).reshape(nL, -1)
        self._cache = (n_used, K_used, P_used, K2)
        return K_used, P_used, K2

    def forward(self, x_query, vis_mark="", train=False, task_id=None):
        if not self.load_key:
            for e in range(self.n_layers):
                self.e_k[e] = self.e_k[e].at[self.task_count].set(self.task_keys_temp)
            self.load_key = True
            self._cache = None
        B, nL, C = x_query.shape
        assert nL == self.n_layers
        p_loss = 0.0
        if train:
            # p[task_count] broadcast to batch — pure broadcast, no kernel needed.
            lp = [jnp.broadcast_to(self.e_p[l][self.task_count][None],
                                   (B, self.n_prompts, self.emb_d))
                  for l in range(nL)]
            return jnp.stack(lp, axis=0), p_loss
        K_used, P_used, K2 = self._stacked()
        out = sprompts_eval_pallas(x_query, K_used, P_used, K2, self.n_keys)
        return out, p_loss


# ----------------------------- reference (plain JAX) ----------------------- #
def _reference_eval(x_query, e_k_list, e_p_list, task_count, n_keys):
    B, nL, _ = x_query.shape
    lp = []
    for l in range(nL):
        p = e_p_list[l]
        k = e_k_list[l][:task_count + 1]                          # (T, nk, D)
        q = x_query[:, l]                                         # (B, D)
        dists = jnp.sum((q[:, None, None, :] - k[None]) ** 2, axis=-1)  # (B, T, nk)
        min_idx = jnp.argmin(dists.reshape(B, -1), axis=1)
        match_tasks = min_idx // n_keys
        lp.append(p[match_tasks])
    return jnp.stack(lp, axis=0)


if __name__ == "__main__":
    # Small shapes consistent with the module.
    emb_d, key_d = 32, 32
    n_tasks, n_keys = 2, 3
    num_prompts, num_layers = 4, 3     # Lp*E = 128 -> lane-dense output block
    B = 2

    rk = jax.random.PRNGKey(0)
    rk, k_tk, k_prev, k_x = jax.random.split(rk, 4)
    task_keys = jax.random.normal(k_tk, (n_keys, key_d), dtype=jnp.float32)
    prev_keys = jax.random.normal(k_prev, (num_layers, n_keys, key_d), dtype=jnp.float32)
    x_query = jax.random.normal(k_x, (B, num_layers, key_d), dtype=jnp.float32)

    module = SPromptsJax(emb_d, n_tasks, n_keys, task_keys, num_prompts,
                         num_layers, key_dim=key_d, seed=0)
    module.process_task_count(1)
    for l in range(num_layers):
        # keys accumulated from the previous task (checkpointed buffer state)
        module.set_keys(l, 0, prev_keys[l])

    # Eval path (Pallas kernel).
    p_eval, p_loss = module.forward(x_query, vis_mark="test", train=False)
    p_eval = jax.block_until_ready(p_eval)
    assert p_eval.shape == (num_layers, B, num_prompts, emb_d)
    assert p_loss == 0.0

    ref = jax.block_until_ready(
        _reference_eval(x_query, module.e_k, module.e_p, module.task_count, n_keys))
    np.testing.assert_allclose(np.asarray(p_eval), np.asarray(ref),
                               rtol=1e-6, atol=1e-6)

    # Train path (pure broadcast; no kernel) — sanity check.
    p_train, _ = module.forward(x_query, vis_mark="test", train=True)
    ref_train = jnp.stack([jnp.broadcast_to(module.e_p[l][module.task_count][None],
                                            (B, num_prompts, emb_d))
                           for l in range(num_layers)], axis=0)
    np.testing.assert_allclose(np.asarray(jax.block_until_ready(p_train)),
                               np.asarray(ref_train), rtol=0, atol=0)

    print("KERNEL_OK")
</pallas_src>

<mosaic_0001>
module attributes {stable_mosaic.version = 11 : i64} {
  func.func @_sprompts_kernel(%arg0: i32, %arg1: memref<2x3x32xf32, #tpu.memory_space<vmem>>, %arg2: memref<3x6x32xf32, #tpu.memory_space<vmem>>, %arg3: memref<3x6xf32, #tpu.memory_space<vmem>>, %arg4: memref<1x6xf32, #tpu.memory_space<vmem>>, %arg5: memref<3x2x128xf32, #tpu.memory_space<vmem>>, %arg6: memref<3x2x128xf32, #tpu.memory_space<vmem>>) attributes {dimension_semantics = [#tpu.dimension_semantics<parallel>], iteration_bounds = array<i64: 1>, scalar_prefetch = 0 : i64, scratch_operands = 0 : i64, tpu.core_type = #tpu.core_type<tc>, window_params = [{transform_indices = @transform_0, window_bounds = array<i64: 2, 3, 32>}, {pipeline_mode = #tpu.pipeline_mode<synchronous>, transform_indices = @transform_1, window_bounds = array<i64: 3, 6, 32>}, {pipeline_mode = #tpu.pipeline_mode<synchronous>, transform_indices = @transform_2, window_bounds = array<i64: 3, 6>}, {pipeline_mode = #tpu.pipeline_mode<synchronous>, transform_indices = @transform_3, window_bounds = array<i64: 1, 6>}, {pipeline_mode = #tpu.pipeline_mode<synchronous>, transform_indices = @transform_4, window_bounds = array<i64: 3, 2, 128>}, {transform_indices = @transform_5, window_bounds = array<i64: 3, 2, 128>}]} {
    %c0 = arith.constant 0 : index
    %c0_0 = arith.constant 0 : index
    %0 = vector.load %arg3[%c0, %c0_0] : memref<3x6xf32, #tpu.memory_space<vmem>>, vector<3x6xf32>
    %c0_1 = arith.constant 0 : index
    %c0_2 = arith.constant 0 : index
    %1 = vector.load %arg4[%c0_1, %c0_2] : memref<1x6xf32, #tpu.memory_space<vmem>>, vector<1x6xf32>
    %2 = tpu.iota {dimensions = array<i32: 1>} : vector<2x2xi32>
    %3 = arith.sitofp %2 : vector<2x2xi32> to vector<2x2xf32>
    %c0_3 = arith.constant 0 : index
    %c0_4 = arith.constant 0 : index
    %c0_5 = arith.constant 0 : index
    %4 = vector.load %arg1[%c0_3, %c0_4, %c0_5] : memref<2x3x32xf32, #tpu.memory_space<vmem>>, vector<2x1x32xf32>
    %5 = vector.shape_cast %4 : vector<2x1x32xf32> to vector<2x32xf32>
    %c0_6 = arith.constant 0 : index
    %c0_7 = arith.constant 0 : index
    %c0_8 = arith.constant 0 : index
    %6 = vector.load %arg2[%c0_6, %c0_7, %c0_8] : memref<3x6x32xf32, #tpu.memory_space<vmem>>, vector<1x6x32xf32>
    %7 = vector.shape_cast %6 : vector<1x6x32xf32> to vector<6x32xf32>
    %cst = arith.constant dense<0.000000e+00> : vector<2x6xf32>
    %8 = tpu.matmul %5, %7, %cst {dimension_numbers = #tpu.dot_dimension_numbers<[1], [1], [0], [0], [0, 0, 1, 0], [], []>} : vector<2x32xf32>, vector<6x32xf32>, vector<2x6xf32> -> vector<2x6xf32>
    %9 = vector.extract_strided_slice %0 {offsets = [0, 0], sizes = [1, 6], strides = [1, 1]} : vector<3x6xf32> to vector<1x6xf32>
    %cst_9 = arith.constant 2.000000e+00 : f32
    %10 = vector.broadcast %cst_9 : f32 to vector<2x6xf32>
    %11 = arith.mulf %10, %8 : vector<2x6xf32>
    %12 = vector.broadcast %9 : vector<1x6xf32> to vector<2x6xf32>
    %13 = arith.subf %12, %11 : vector<2x6xf32>
    %cst_10 = arith.constant dense<0x7F800000> : vector<2xf32>
    %14 = vector.multi_reduction <minimumf>, %13, %cst_10 [1] : vector<2x6xf32> to vector<2xf32>
    %15 = vector.shape_cast %14 : vector<2xf32> to vector<2x1xf32>
    %16 = vector.broadcast %15 : vector<2x1xf32> to vector<2x6xf32>
    %17 = arith.cmpf oeq, %13, %16 : vector<2x6xf32>
    %cst_11 = arith.constant 2.000000e+00 : f32
    %18 = vector.shape_cast %1 : vector<1x6xf32> to vector<1x6xf32>
    %19 = vector.broadcast %18 : vector<1x6xf32> to vector<2x6xf32>
    %20 = vector.broadcast %cst_11 : f32 to vector<2x6xf32>
    %21 = arith.select %17, %19, %20 : vector<2x6xi1>, vector<2x6xf32>
    %cst_12 = arith.constant dense<0x7F800000> : vector<2xf32>
    %22 = vector.multi_reduction <minimumf>, %21, %cst_12 [1] : vector<2x6xf32> to vector<2xf32>
    %23 = vector.shape_cast %22 : vector<2xf32> to vector<2x1xf32>
    %c0_13 = arith.constant 0 : index
    %c0_14 = arith.constant 0 : index
    %c0_15 = arith.constant 0 : index
    %24 = vector.load %arg5[%c0_13, %c0_14, %c0_15] : memref<3x2x128xf32, #tpu.memory_space<vmem>>, vector<1x2x128xf32>
    %25 = vector.shape_cast %24 : vector<1x2x128xf32> to vector<2x128xf32>
    %26 = vector.broadcast %23 : vector<2x1xf32> to vector<2x2xf32>
    %27 = arith.cmpf oeq, %3, %26 : vector<2x2xf32>
    %28 = arith.extui %27 : vector<2x2xi1> to vector<2x2xi32>
    %29 = arith.sitofp %28 : vector<2x2xi32> to vector<2x2xf32>
    %cst_16 = arith.constant dense<0.000000e+00> : vector<2x128xf32>
    %30 = tpu.matmul %29, %25, %cst_16 {dimension_numbers = #tpu.dot_dimension_numbers<[1], [0], [0], [1], [0, 0, 1, 1], [], []>} : vector<2x2xf32>, vector<2x128xf32>, vector<2x128xf32> -> vector<2x128xf32>
    %c0_17 = arith.constant 0 : index
    %c0_18 = arith.constant 0 : index
    %c0_19 = arith.constant 0 : index
    %31 = vector.load %arg6[%c0_17, %c0_18, %c0_19] : memref<3x2x128xf32, #tpu.memory_space<vmem>>, vector<1x2x128xf32>
    %32 = vector.shape_cast %31 : vector<1x2x128xf32> to vector<2x128xf32>
    %33 = vector.shape_cast %30 : vector<2x128xf32> to vector<1x2x128xf32>
    tpu.vector_store %arg6[%c0_17, %c0_18, %c0_19], %33 {strides = array<i32>} : memref<3x2x128xf32, #tpu.memory_space<vmem>>, vector<1x2x128xf32>,
    %c0_20 = arith.constant 0 : index
    %c1 = arith.constant 1 : index
    %c0_21 = arith.constant 0 : index
    %34 = vector.load %arg1[%c0_20, %c1, %c0_21] : memref<2x3x32xf32, #tpu.memory_space<vmem>>, vector<2x1x32xf32>
    %35 = vector.shape_cast %34 : vector<2x1x32xf32> to vector<2x32xf32>
    %c1_22 = arith.constant 1 : index
    %c0_23 = arith.constant 0 : index
    %c0_24 = arith.constant 0 : index
    %36 = vector.load %arg2[%c1_22, %c0_23, %c0_24] : memref<3x6x32xf32, #tpu.memory_space<vmem>>, vector<1x6x32xf32>
    %37 = vector.shape_cast %36 : vector<1x6x32xf32> to vector<6x32xf32>
    %cst_25 = arith.constant dense<0.000000e+00> : vector<2x6xf32>
    %38 = tpu.matmul %35, %37, %cst_25 {dimension_numbers = #tpu.dot_dimension_numbers<[1], [1], [0], [0], [0, 0, 1, 0], [], []>} : vector<2x32xf32>, vector<6x32xf32>, vector<2x6xf32> -> vector<2x6xf32>
    %39 = vector.extract_strided_slice %0 {offsets = [1, 0], sizes = [1, 6], strides = [1, 1]} : vector<3x6xf32> to vector<1x6xf32>
    %cst_26 = arith.constant 2.000000e+00 : f32
    %40 = vector.broadcast %cst_26 : f32 to vector<2x6xf32>
    %41 = arith.mulf %40, %38 : vector<2x6xf32>
    %42 = vector.broadcast %39 : vector<1x6xf32> to vector<2x6xf32>
    %43 = arith.subf %42, %41 : vector<2x6xf32>
    %cst_27 = arith.constant dense<0x7F800000> : vector<2xf32>
    %44 = vector.multi_reduction <minimumf>, %43, %cst_27 [1] : vector<2x6xf32> to vector<2xf32>
    %45 = vector.shape_cast %44 : vector<2xf32> to vector<2x1xf32>
    %46 = vector.broadcast %45 : vector<2x1xf32> to vector<2x6xf32>
    %47 = arith.cmpf oeq, %43, %46 : vector<2x6xf32>
    %cst_28 = arith.constant 2.000000e+00 : f32
    %48 = vector.shape_cast %1 : vector<1x6xf32> to vector<1x6xf32>
    %49 = vector.broadcast %48 : vector<1x6xf32> to vector<2x6xf32>
    %50 = vector.broadcast %cst_28 : f32 to vector<2x6xf32>
    %51 = arith.select %47, %49, %50 : vector<2x6xi1>, vector<2x6xf32>
    %cst_29 = arith.constant dense<0x7F800000> : vector<2xf32>
    %52 = vector.multi_reduction <minimumf>, %51, %cst_29 [1] : vector<2x6xf32> to vector<2xf32>
    %53 = vector.shape_cast %52 : vector<2xf32> to vector<2x1xf32>
    %c1_30 = arith.constant 1 : index
    %c0_31 = arith.constant 0 : index
    %c0_32 = arith.constant 0 : index
    %54 = vector.load %arg5[%c1_30, %c0_31, %c0_32] : memref<3x2x128xf32, #tpu.memory_space<vmem>>, vector<1x2x128xf32>
    %55 = vector.shape_cast %54 : vector<1x2x128xf32> to vector<2x128xf32>
    %56 = vector.broadcast %53 : vector<2x1xf32> to vector<2x2xf32>
    %57 = arith.cmpf oeq, %3, %56 : vector<2x2xf32>
    %58 = arith.extui %57 : vector<2x2xi1> to vector<2x2xi32>
    %59 = arith.sitofp %58 : vector<2x2xi32> to vector<2x2xf32>
    %cst_33 = arith.constant dense<0.000000e+00> : vector<2x128xf32>
    %60 = tpu.matmul %59, %55, %cst_33 {dimension_numbers = #tpu.dot_dimension_numbers<[1], [0], [0], [1], [0, 0, 1, 1], [], []>} : vector<2x2xf32>, vector<2x128xf32>, vector<2x128xf32> -> vector<2x128xf32>
    %c1_34 = arith.constant 1 : index
    %c0_35 = arith.constant 0 : index
    %c0_36 = arith.constant 0 : index
    %61 = vector.load %arg6[%c1_34, %c0_35, %c0_36] : memref<3x2x128xf32, #tpu.memory_space<vmem>>, vector<1x2x128xf32>
    %62 = vector.shape_cast %61 : vector<1x2x128xf32> to vector<2x128xf32>
    %63 = vector.shape_cast %60 : vector<2x128xf32> to vector<1x2x128xf32>
    tpu.vector_store %arg6[%c1_34, %c0_35, %c0_36], %63 {strides = array<i32>} : memref<3x2x128xf32, #tpu.memory_space<vmem>>, vector<1x2x128xf32>,
    %c0_37 = arith.constant 0 : index
    %c2 = arith.constant 2 : index
    %c0_38 = arith.constant 0 : index
    %64 = vector.load %arg1[%c0_37, %c2, %c0_38] : memref<2x3x32xf32, #tpu.memory_space<vmem>>, vector<2x1x32xf32>
    %65 = vector.shape_cast %64 : vector<2x1x32xf32> to vector<2x32xf32>
    %c2_39 = arith.constant 2 : index
    %c0_40 = arith.constant 0 : index
    %c0_41 = arith.constant 0 : index
    %66 = vector.load %arg2[%c2_39, %c0_40, %c0_41] : memref<3x6x32xf32, #tpu.memory_space<vmem>>, vector<1x6x32xf32>
    %67 = vector.shape_cast %66 : vector<1x6x32xf32> to vector<6x32xf32>
    %cst_42 = arith.constant dense<0.000000e+00> : vector<2x6xf32>
    %68 = tpu.matmul %65, %67, %cst_42 {dimension_numbers = #tpu.dot_dimension_numbers<[1], [1], [0], [0], [0, 0, 1, 0], [], []>} : vector<2x32xf32>, vector<6x32xf32>, vector<2x6xf32> -> vector<2x6xf32>
    %69 = vector.extract_strided_slice %0 {offsets = [2, 0], sizes = [1, 6], strides = [1, 1]} : vector<3x6xf32> to vector<1x6xf32>
    %cst_43 = arith.constant 2.000000e+00 : f32
    %70 = vector.broadcast %cst_43 : f32 to vector<2x6xf32>
    %71 = arith.mulf %70, %68 : vector<2x6xf32>
    %72 = vector.broadcast %69 : vector<1x6xf32> to vector<2x6xf32>
    %73 = arith.subf %72, %71 : vector<2x6xf32>
    %cst_44 = arith.constant dense<0x7F800000> : vector<2xf32>
    %74 = vector.multi_reduction <minimumf>, %73, %cst_44 [1] : vector<2x6xf32> to vector<2xf32>
    %75 = vector.shape_cast %74 : vector<2xf32> to vector<2x1xf32>
    %76 = vector.broadcast %75 : vector<2x1xf32> to vector<2x6xf32>
    %77 = arith.cmpf oeq, %73, %76 : vector<2x6xf32>
    %cst_45 = arith.constant 2.000000e+00 : f32
    %78 = vector.shape_cast %1 : vector<1x6xf32> to vector<1x6xf32>
    %79 = vector.broadcast %78 : vector<1x6xf32> to vector<2x6xf32>
    %80 = vector.broadcast %cst_45 : f32 to vector<2x6xf32>
    %81 = arith.select %77, %79, %80 : vector<2x6xi1>, vector<2x6xf32>
    %cst_46 = arith.constant dense<0x7F800000> : vector<2xf32>
    %82 = vector.multi_reduction <minimumf>, %81, %cst_46 [1] : vector<2x6xf32> to vector<2xf32>
    %83 = vector.shape_cast %82 : vector<2xf32> to vector<2x1xf32>
    %c2_47 = arith.constant 2 : index
    %c0_48 = arith.constant 0 : index
    %c0_49 = arith.constant 0 : index
    %84 = vector.load %arg5[%c2_47, %c0_48, %c0_49] : memref<3x2x128xf32, #tpu.memory_space<vmem>>, vector<1x2x128xf32>
    %85 = vector.shape_cast %84 : vector<1x2x128xf32> to vector<2x128xf32>
    %86 = vector.broadcast %83 : vector<2x1xf32> to vector<2x2xf32>
    %87 = arith.cmpf oeq, %3, %86 : vector<2x2xf32>
    %88 = arith.extui %87 : vector<2x2xi1> to vector<2x2xi32>
    %89 = arith.sitofp %88 : vector<2x2xi32> to vector<2x2xf32>
    %cst_50 = arith.constant dense<0.000000e+00> : vector<2x128xf32>
    %90 = tpu.matmul %89, %85, %cst_50 {dimension_numbers = #tpu.dot_dimension_numbers<[1], [0], [0], [1], [0, 0, 1, 1], [], []>} : vector<2x2xf32>, vector<2x128xf32>, vector<2x128xf32> -> vector<2x128xf32>
    %c2_51 = arith.constant 2 : index
    %c0_52 = arith.constant 0 : index
    %c0_53 = arith.constant 0 : index
    %91 = vector.load %arg6[%c2_51, %c0_52, %c0_53] : memref<3x2x128xf32, #tpu.memory_space<vmem>>, vector<1x2x128xf32>
    %92 = vector.shape_cast %91 : vector<1x2x128xf32> to vector<2x128xf32>
    %93 = vector.shape_cast %90 : vector<2x128xf32> to vector<1x2x128xf32>
    tpu.vector_store %arg6[%c2_51, %c0_52, %c0_53], %93 {strides = array<i32>} : memref<3x2x128xf32, #tpu.memory_space<vmem>>, vector<1x2x128xf32>,
    return
  }
  func.func @transform_0(%arg0: i32) -> (i32, i32, i32) {
    %c0_i32 = arith.constant 0 : i32
    %c0_i32_0 = arith.constant 0 : i32
    %c0_i32_1 = arith.constant 0 : i32
    return %arg0, %c0_i32, %c0_i32_0 : i32, i32, i32
  }
  func.func @transform_1(%arg0: i32) -> (i32, i32, i32) {
    %c0_i32 = arith.constant 0 : i32
    %c0_i32_0 = arith.constant 0 : i32
    %c0_i32_1 = arith.constant 0 : i32
    %c0_i32_2 = arith.constant 0 : i32
    return %c0_i32, %c0_i32_0, %c0_i32_1 : i32, i32, i32
  }
  func.func @transform_2(%arg0: i32) -> (i32, i32) {
    %c0_i32 = arith.constant 0 : i32
    %c0_i32_0 = arith.constant 0 : i32
    %c0_i32_1 = arith.constant 0 : i32
    return %c0_i32, %c0_i32_0 : i32, i32
  }
  func.func @transform_3(%arg0: i32) -> (i32, i32) {
    %c0_i32 = arith.constant 0 : i32
    %c0_i32_0 = arith.constant 0 : i32
    %c0_i32_1 = arith.constant 0 : i32
    return %c0_i32, %c0_i32_0 : i32, i32
  }
  func.func @transform_4(%arg0: i32) -> (i32, i32, i32) {
    %c0_i32 = arith.constant 0 : i32
    %c0_i32_0 = arith.constant 0 : i32
    %c0_i32_1 = arith.constant 0 : i32
    %c0_i32_2 = arith.constant 0 : i32
    return %c0_i32, %c0_i32_0, %c0_i32_1 : i32, i32, i32
  }
  func.func @transform_5(%arg0: i32) -> (i32, i32, i32) {
    %c0_i32 = arith.constant 0 : i32
    %c0_i32_0 = arith.constant 0 : i32
    %c0_i32_1 = arith.constant 0 : i32
    return %c0_i32, %arg0, %c0_i32_0 : i32, i32, i32
  }
}

</mosaic_0001>

<llo_original>
// kernel: tpu_custom_call.1
$region0: #{tpu_custom_call.1}
  #allocation0 [shape = 'u32[]', space=smem, size = 0x4, offset = 0x4, fixed_abs, tag = 'smem constant byte address 0x4 - core index']
  #allocation1 [shape = 'u32[144,128]{1,0:T(1,128)}', space=vmem, size = 0x12000, scoped, tag = 'internal scratch']
  %s0 = inlined_call_operand.vmem [shape: f32[2,3,32], index: 0, kind: input, shape index: {}]
  %s1 = inlined_call_operand.hbm [shape: f32[3,6,32], index: 1, kind: input, shape index: {}]
  %s2 = inlined_call_operand.vmem [shape: f32[3,6], index: 2, kind: input, shape index: {}]
  %s3 = inlined_call_operand.vmem [shape: f32[1,6], index: 3, kind: input, shape index: {}]
  %s4 = inlined_call_operand.vmem [shape: f32[3,2,128], index: 4, kind: input, shape index: {}]
  %s5 = inlined_call_operand.hbm [shape: f32[3,2,128], index: 5, kind: output, shape index: {}]
  %s6 = sld [smem:[#allocation0]]
  $region34: #{tpu_custom_call.1} parent=0
    _
  %s8 = ssub.s32 1, %s6
  %s9 = scalar_select 0, %s8, %s6
  $region1: #{tpu_custom_call.1} parent=0
    #allocation2 [shape = 'u8[12288]{0}', space=vmem, size = 0x3000, scoped, tag = 'input window, operand 1, single buffered']
    #allocation3 [shape = 's32[1]{0}', space=sflag, size = 0x4, scoped, tag = 'scoped memory for tpu_custom_call.1']
    #allocation4 [shape = 's32[1]{0}', space=sflag, size = 0x4, scoped, tag = 'scoped memory for tpu_custom_call.1']
    #allocation5 [shape = 'u8[3072]{0}', space=vmem, size = 0xc00, scoped, tag = 'output window, operand 0, single buffered']
    %10 = vsyncpa [#allocation3], 0
    %11 = vsyncpa [#allocation4], 0
    // Predicated region
    $region2: #{tpu_custom_call.1} parent=1 // pred_check
      _
    $region3: #{tpu_custom_call.1} parent=1 // pred_check_branch
      %13 = sbr.rel (0) target = $region5
    $region4: #{tpu_custom_call.1} parent=1 // pred_region
      _
    $region5: #{tpu_custom_call.1} parent=1 // pred_fallthru
      _
    // Predicated region
    $region6: #{tpu_custom_call.1} parent=1 // pred_check
      _
    $region7: #{tpu_custom_call.1} parent=1 // pred_check_branch
      %15 = sbr.rel (0) target = $region9
    $region8: #{tpu_custom_call.1} parent=1 // pred_region
      %s17 = ssub.s32 384, 384
      %18 = vsyncadd [#allocation3], %s17
      %s19 = sshll.u32 [#allocation2], 4
      %s20 = int_to_ptr.vmem [resolvable:$true] %s19
      %25 = dma.hbm_to_vmem [thread:$0]  %s1, 384, %s20, [#allocation3], 128, 128, 8
    $region9: #{tpu_custom_call.1} parent=1 // pred_fallthru
      _
    // Predicated region
    $region10: #{tpu_custom_call.1} parent=1 // pred_check
      _
    $region11: #{tpu_custom_call.1} parent=1 // pred_check_branch
      %27 = sbr.rel (0) target = $region13
    $region12: #{tpu_custom_call.1} parent=1 // pred_region
      _
    $region13: #{tpu_custom_call.1} parent=1 // pred_fallthru
      _
    // Predicated region
    $region14: #{tpu_custom_call.1} parent=1 // pred_check
      _
    $region15: #{tpu_custom_call.1} parent=1 // pred_check_branch
      %29 = sbr.rel (0) target = $region17
    $region16: #{tpu_custom_call.1} parent=1 // pred_region
      _
    $region17: #{tpu_custom_call.1} parent=1 // pred_fallthru
      _
    // Predicated region
    $region18: #{tpu_custom_call.1} parent=1 // pred_check
      _
    $region19: #{tpu_custom_call.1} parent=1 // pred_check_branch
      %31 = sbr.rel (0) target = $region21
    $region20: #{tpu_custom_call.1} parent=1 // pred_region
      _
    $region21: #{tpu_custom_call.1} parent=1 // pred_fallthru
      _
    // Predicated region
    $region22: #{tpu_custom_call.1} parent=1 // pred_check
      _
    $region23: #{tpu_custom_call.1} parent=1 // pred_check_branch
      %33 = sbr.rel (0) target = $region25
    $region24: #{tpu_custom_call.1} parent=1 // pred_region
      %34 = dma.done [#allocation3], 384
    $region25: #{tpu_custom_call.1} parent=1 // pred_fallthru
      _
    %v35 = vld [vmem:[%s2] sm:$0x7]
    %v36 = vld [vmem:[%s3] sm:$0x1]
    %v37 = vlaneseq
    %v38 = vand.u32 %v37, 127
    %v39 = vcvt.s32.f32 %v38
    %v40 = vld [vmem:[%s0] sm:$0x1]
    %v41 = vld [vmem:[%s0 + $0x4] sm:$0x1]
    %v42 = vld [vmem:[#allocation2] sm:$0x3f]
    %v45 = vrot.slane %v41, 7
    %vm46 = vcmask 1041409
    %v47 = vsel %vm46, %v45, %v40
    %vm48 = vcmask 261120
    %v49 = vsel %vm48, %v47, 0
    %v52 = vsel %vm48, %v42, 0
    %54 = vmatprep.subr.mxu0 0.0
    %55 = vmatpush1.xpose.msra.mxu0 %v52
    %56 = vmatprep.subr.mxu0 0.0
    %57 = vmatpush1.xpose.msra.mxu0 0.0
    %58 = vmatprep.subr.mxu0 0.0
    %59 = vmatpush1.xpose.msra.mxu0 0.0
    %60 = vmatprep.subr.mxu0 0.0
    %61 = vmatpush1.xpose.msra.mxu0 0.0
    %62 = vmatprep.subr.mxu0 0.0
    %63 = vmatpush1.xpose.msra.mxu0 0.0
    %64 = vmatprep.subr.mxu0 0.0
    %65 = vmatpush1.xpose.msra.mxu0 0.0
    %66 = vmatprep.subr.mxu0 0.0
    %67 = vmatpush1.xpose.msra.mxu0 0.0
    %68 = vmatprep.subr.mxu0 0.0
    %69 = vmatpush1.xpose.msra.mxu0 0.0
    %70 = vmatprep.subr.mxu0 0.0
    %71 = vmatpush1.xpose.msra.mxu0 0.0
    %72 = vmatprep.subr.mxu0 0.0
    %73 = vmatpush1.xpose.msra.mxu0 0.0
    %74 = vmatprep.subr.mxu0 0.0
    %75 = vmatpush1.xpose.msra.mxu0 0.0
    %76 = vmatprep.subr.mxu0 0.0
    %77 = vmatpush1.xpose.msra.mxu0 0.0
    %78 = vmatprep.subr.mxu0 0.0
    %79 = vmatpush1.xpose.msra.mxu0 0.0
    %80 = vmatprep.subr.mxu0 0.0
    %81 = vmatpush1.xpose.msra.mxu0 0.0
    %82 = vmatprep.subr.mxu0 0.0
    %83 = vmatpush1.xpose.msra.mxu0 0.0
    %84 = vmatprep.subr.mxu0 0.0
    %85 = vmatpush1.xpose.msra.mxu0 0.0
    %86 = vmatprep.subr.mxu0 0.0
    %87 = vmatpush1.xpose.msra.mxu0 0.0
    %88 = vmatprep.subr.mxu0 0.0
    %89 = vmatpush1.xpose.msra.mxu0 0.0
    %90 = vmatprep.subr.mxu0 0.0
    %91 = vmatpush1.xpose.msra.mxu0 0.0
    %92 = vmatprep.subr.mxu0 0.0
    %93 = vmatpush1.xpose.msra.mxu0 0.0
    %94 = vmatprep.subr.mxu0 0.0
    %95 = vmatpush1.xpose.msra.mxu0 0.0
    %96 = vmatprep.subr.mxu0 0.0
    %97 = vmatpush1.xpose.msra.mxu0 0.0
    %98 = vmatprep.subr.mxu0 0.0
    %99 = vmatpush1.xpose.msra.mxu0 0.0
    %100 = vmatprep.subr.mxu0 0.0
    %101 = vmatpush1.xpose.msra.mxu0 0.0
    %102 = vmatprep.subr.mxu0 0.0
    %103 = vmatpush1.xpose.msra.mxu0 0.0
    %104 = vmatprep.subr.mxu0 0.0
    %105 = vmatpush1.xpose.msra.mxu0 0.0
    %106 = vmatprep.subr.mxu0 0.0
    %107 = vmatpush1.xpose.msra.mxu0 0.0
    %108 = vmatprep.subr.mxu0 0.0
    %109 = vmatpush1.xpose.msra.mxu0 0.0
    %110 = vmatprep.subr.mxu0 0.0
    %111 = vmatpush1.xpose.msra.mxu0 0.0
    %112 = vmatprep.subr.mxu0 0.0
    %113 = vmatpush1.xpose.msra.mxu0 0.0
    %114 = vmatprep.subr.mxu0 0.0
    %115 = vmatpush1.xpose.msra.mxu0 0.0
    %116 = vmatprep.subr.mxu0 0.0
    %117 = vmatpush1.xpose.msra.mxu0 0.0
    %118 = vmatprep.mubr.f32.mxu0 0.0
    %119 = vmatmul.mubr.f32.gmra.mrb[0].mxu0 %v49
    %v120 = vpop.f32.mrb[0].mxu0
    %v121 = vadd.f32 0.0, %v120
    %v122 = vpop.f32.mrb[0].mxu0
    %123 = vdwg.mxu0
    %v124 = vmul.f32 %v121, 2.0
    %v125 = vlaneseq
    %v126 = vshrl.u32 %v125, 7
    %v127 = vsub.s32 0, %v126
    %v128 = vrot.slane %v35, %v127
    %v129 = vsub.f32 %v128, %v124
    %vm130 = vcmask 41984
    %v131 = vsel %vm130, %v129, inf
    %132 = vmin.xlane.f32.xlu0 %v131
    %v133 = vpop.xlane.xlu0 %132
    %vm134 = vcmp.eq.f32.partialorder %v129, %v133
    %v136 = vlaneseq
    %v137 = vshrl.u32 %v136, 7
    %v138 = vsub.s32 0, %v137
    %v139 = vrot.slane %v36, %v138
    %v141 = vsel %vm134, %v139, 2.0
    %v142 = vsel %vm130, %v141, inf
    %143 = vmin.xlane.f32.xlu0 %v142
    %v144 = vpop.xlane.xlu0 %143
    %v145 = vld [vmem:[%s4] sm:$0x3]
    %vm146 = vcmp.eq.f32.partialorder %v39, %v144
    %v147 = vsel %vm146, 1, 0
    %v148 = vcvt.s32.f32 %v147
    %vm149 = vcmask 15360
    %v151 = vsel %vm149, %v148, 0
    %vm153 = vcmask 1041408
    %v155 = vsel %vm153, %v145, 0
    %157 = vmatprep.subr.mxu0 0.0
    %158 = vmatpush1.msra.mxu0 %v155
    %159 = vmatprep.subr.mxu0 0.0
    %160 = vmatpush1.msra.mxu0 0.0
    %161 = vmatprep.subr.mxu0 0.0
    %162 = vmatpush1.msra.mxu0 0.0
    %163 = vmatprep.subr.mxu0 0.0
    %164 = vmatpush1.msra.mxu0 0.0
    %165 = vmatprep.subr.mxu0 0.0
    %166 = vmatpush1.msra.mxu0 0.0
    %167 = vmatprep.subr.mxu0 0.0
    %168 = vmatpush1.msra.mxu0 0.0
    %169 = vmatprep.subr.mxu0 0.0
    %170 = vmatpush1.msra.mxu0 0.0
    %171 = vmatprep.subr.mxu0 0.0
    %172 = vmatpush1.msra.mxu0 0.0
    %173 = vmatprep.subr.mxu0 0.0
    %174 = vmatpush1.msra.mxu0 0.0
    %175 = vmatprep.subr.mxu0 0.0
    %176 = vmatpush1.msra.mxu0 0.0
    %177 = vmatprep.subr.mxu0 0.0
    %178 = vmatpush1.msra.mxu0 0.0
    %179 = vmatprep.subr.mxu0 0.0
    %180 = vmatpush1.msra.mxu0 0.0
    %181 = vmatprep.subr.mxu0 0.0
    %182 = vmatpush1.msra.mxu0 0.0
    %183 = vmatprep.subr.mxu0 0.0
    %184 = vmatpush1.msra.mxu0 0.0
    %185 = vmatprep.subr.mxu0 0.0
    %186 = vmatpush1.msra.mxu0 0.0
    %187 = vmatprep.subr.mxu0 0.0
    %188 = vmatpush1.msra.mxu0 0.0
    %189 = vmatprep.subr.mxu0 0.0
    %190 = vmatpush1.msra.mxu0 0.0
    %191 = vmatprep.subr.mxu0 0.0
    %192 = vmatpush1.msra.mxu0 0.0
    %193 = vmatprep.subr.mxu0 0.0
    %194 = vmatpush1.msra.mxu0 0.0
    %195 = vmatprep.subr.mxu0 0.0
    %196 = vmatpush1.msra.mxu0 0.0
    %197 = vmatprep.subr.mxu0 0.0
    %198 = vmatpush1.msra.mxu0 0.0
    %199 = vmatprep.subr.mxu0 0.0
    %200 = vmatpush1.msra.mxu0 0.0
    %201 = vmatprep.subr.mxu0 0.0
    %202 = vmatpush1.msra.mxu0 0.0
    %203 = vmatprep.subr.mxu0 0.0
    %204 = vmatpush1.msra.mxu0 0.0
    %205 = vmatprep.subr.mxu0 0.0
    %206 = vmatpush1.msra.mxu0 0.0
    %207 = vmatprep.subr.mxu0 0.0
    %208 = vmatpush1.msra.mxu0 0.0
    %209 = vmatprep.subr.mxu0 0.0
    %210 = vmatpush1.msra.mxu0 0.0
    %211 = vmatprep.subr.mxu0 0.0
    %212 = vmatpush1.msra.mxu0 0.0
    %213 = vmatprep.subr.mxu0 0.0
    %214 = vmatpush1.msra.mxu0 0.0
    %215 = vmatprep.subr.mxu0 0.0
    %216 = vmatpush1.msra.mxu0 0.0
    %217 = vmatprep.subr.mxu0 0.0
    %218 = vmatpush1.msra.mxu0 0.0
    %219 = vmatprep.subr.mxu0 0.0
    %220 = vmatpush1.msra.mxu0 0.0
    %221 = vmatprep.mubr.f32.mxu0 0.0
    %222 = vmatmul.mubr.f32.gmra.mrb[0].mxu0 %v151
    %v223 = vpop.f32.mrb[0].mxu0
    %v224 = vadd.f32 0.0, %v223
    %v225 = vpop.f32.mrb[0].mxu0
    %226 = vdwg.mxu0
    %227 = vst [vmem:[#allocation5] sm:$0x3] %v224
    %v228 = vld [vmem:[%s0 + $0x1] sm:$0x1]
    %v229 = vld [vmem:[%s0 + $0x5] sm:$0x1]
    %s230 = scalar_lea.vmem [#allocation2], 8
    %v231 = vld [vmem:[%s230] sm:$0x3f]
    %v234 = vrot.slane %v229, 7
    %v235 = vsel %vm46, %v234, %v228
    %v236 = vsel %vm48, %v235, 0
    %v239 = vsel %vm48, %v231, 0
    %241 = vmatprep.subr.mxu0 0.0
    %242 = vmatpush1.xpose.msra.mxu0 %v239
    %243 = vmatprep.subr.mxu0 0.0
    %244 = vmatpush1.xpose.msra.mxu0 0.0
    %245 = vmatprep.subr.mxu0 0.0
    %246 = vmatpush1.xpose.msra.mxu0 0.0
    %247 = vmatprep.subr.mxu0 0.0
    %248 = vmatpush1.xpose.msra.mxu0 0.0
    %249 = vmatprep.subr.mxu0 0.0
    %250 = vmatpush1.xpose.msra.mxu0 0.0
    %251 = vmatprep.subr.mxu0 0.0
    %252 = vmatpush1.xpose.msra.mxu0 0.0
    %253 = vmatprep.subr.mxu0 0.0
    %254 = vmatpush1.xpose.msra.mxu0 0.0
    %255 = vmatprep.subr.mxu0 0.0
    %256 = vmatpush1.xpose.msra.mxu0 0.0
    %257 = vmatprep.subr.mxu0 0.0
    %258 = vmatpush1.xpose.msra.mxu0 0.0
    %259 = vmatprep.subr.mxu0 0.0
    %260 = vmatpush1.xpose.msra.mxu0 0.0
    %261 = vmatprep.subr.mxu0 0.0
    %262 = vmatpush1.xpose.msra.mxu0 0.0
    %263 = vmatprep.subr.mxu0 0.0
    %264 = vmatpush1.xpose.msra.mxu0 0.0
    %265 = vmatprep.subr.mxu0 0.0
    %266 = vmatpush1.xpose.msra.mxu0 0.0
    %267 = vmatprep.subr.mxu0 0.0
    %268 = vmatpush1.xpose.msra.mxu0 0.0
    %269 = vmatprep.subr.mxu0 0.0
    %270 = vmatpush1.xpose.msra.mxu0 0.0
    %271 = vmatprep.subr.mxu0 0.0
    %272 = vmatpush1.xpose.msra.mxu0 0.0
    %273 = vmatprep.subr.mxu0 0.0
    %274 = vmatpush1.xpose.msra.mxu0 0.0
    %275 = vmatprep.subr.mxu0 0.0
    %276 = vmatpush1.xpose.msra.mxu0 0.0
    %277 = vmatprep.subr.mxu0 0.0
    %278 = vmatpush1.xpose.msra.mxu0 0.0
    %279 = vmatprep.subr.mxu0 0.0
    %280 = vmatpush1.xpose.msra.mxu0 0.0
    %281 = vmatprep.subr.mxu0 0.0
    %282 = vmatpush1.xpose.msra.mxu0 0.0
    %283 = vmatprep.subr.mxu0 0.0
    %284 = vmatpush1.xpose.msra.mxu0 0.0
    %285 = vmatprep.subr.mxu0 0.0
    %286 = vmatpush1.xpose.msra.mxu0 0.0
    %287 = vmatprep.subr.mxu0 0.0
    %288 = vmatpush1.xpose.msra.mxu0 0.0
    %289 = vmatprep.subr.mxu0 0.0
    %290 = vmatpush1.xpose.msra.mxu0 0.0
    %291 = vmatprep.subr.mxu0 0.0
    %292 = vmatpush1.xpose.msra.mxu0 0.0
    %293 = vmatprep.subr.mxu0 0.0
    %294 = vmatpush1.xpose.msra.mxu0 0.0
    %295 = vmatprep.subr.mxu0 0.0
    %296 = vmatpush1.xpose.msra.mxu0 0.0
    %297 = vmatprep.subr.mxu0 0.0
    %298 = vmatpush1.xpose.msra.mxu0 0.0
    %299 = vmatprep.subr.mxu0 0.0
    %300 = vmatpush1.xpose.msra.mxu0 0.0
    %301 = vmatprep.subr.mxu0 0.0
    %302 = vmatpush1.xpose.msra.mxu0 0.0
    %303 = vmatprep.subr.mxu0 0.0
    %304 = vmatpush1.xpose.msra.mxu0 0.0
    %305 = vmatprep.mubr.f32.mxu0 0.0
    %306 = vmatmul.mubr.f32.gmra.mrb[0].mxu0 %v236
    %v307 = vpop.f32.mrb[0].mxu0
    %v308 = vadd.f32 0.0, %v307
    %v309 = vpop.f32.mrb[0].mxu0
    %310 = vdwg.mxu0
    %v311 = vmul.f32 %v308, 2.0
    %v312 = vlaneseq
    %v313 = vshrl.u32 %v312, 7
    %v314 = vsub.s32 1, %v313
    %v315 = vrot.slane %v35, %v314
    %v316 = vsub.f32 %v315, %v311
    %v317 = vsel %vm130, %v316, inf
    %318 = vmin.xlane.f32.xlu0 %v317
    %v319 = vpop.xlane.xlu0 %318
    %vm320 = vcmp.eq.f32.partialorder %v316, %v319
    %v321 = vsel %vm320, %v139, 2.0
    %v322 = vsel %vm130, %v321, inf
    %323 = vmin.xlane.f32.xlu0 %v322
    %v324 = vpop.xlane.xlu0 %323
    %s325 = scalar_lea.vmem %s4, 2
    %v326 = vld [vmem:[%s325] sm:$0x3]
    %vm327 = vcmp.eq.f32.partialorder %v39, %v324
    %v328 = vsel %vm327, 1, 0
    %v329 = vcvt.s32.f32 %v328
    %v331 = vsel %vm149, %v329, 0
    %v334 = vsel %vm153, %v326, 0
    %336 = vmatprep.subr.mxu0 0.0
    %337 = vmatpush1.msra.mxu0 %v334
    %338 = vmatprep.subr.mxu0 0.0
    %339 = vmatpush1.msra.mxu0 0.0
    %340 = vmatprep.subr.mxu0 0.0
    %341 = vmatpush1.msra.mxu0 0.0
    %342 = vmatprep.subr.mxu0 0.0
    %343 = vmatpush1.msra.mxu0 0.0
    %344 = vmatprep.subr.mxu0 0.0
    %345 = vmatpush1.msra.mxu0 0.0
    %346 = vmatprep.subr.mxu0 0.0
    %347 = vmatpush1.msra.mxu0 0.0
    %348 = vmatprep.subr.mxu0 0.0
    %349 = vmatpush1.msra.mxu0 0.0
    %350 = vmatprep.subr.mxu0 0.0
    %351 = vmatpush1.msra.mxu0 0.0
    %352 = vmatprep.subr.mxu0 0.0
    %353 = vmatpush1.msra.mxu0 0.0
    %354 = vmatprep.subr.mxu0 0.0
    %355 = vmatpush1.msra.mxu0 0.0
    %356 = vmatprep.subr.mxu0 0.0
    %357 = vmatpush1.msra.mxu0 0.0
    %358 = vmatprep.subr.mxu0 0.0
    %359 = vmatpush1.msra.mxu0 0.0
    %360 = vmatprep.subr.mxu0 0.0
    %361 = vmatpush1.msra.mxu0 0.0
    %362 = vmatprep.subr.mxu0 0.0
    %363 = vmatpush1.msra.mxu0 0.0
    %364 = vmatprep.subr.mxu0 0.0
    %365 = vmatpush1.msra.mxu0 0.0
    %366 = vmatprep.subr.mxu0 0.0
    %367 = vmatpush1.msra.mxu0 0.0
    %368 = vmatprep.subr.mxu0 0.0
    %369 = vmatpush1.msra.mxu0 0.0
    %370 = vmatprep.subr.mxu0 0.0
    %371 = vmatpush1.msra.mxu0 0.0
    %372 = vmatprep.subr.mxu0 0.0
    %373 = vmatpush1.msra.mxu0 0.0
    %374 = vmatprep.subr.mxu0 0.0
    %375 = vmatpush1.msra.mxu0 0.0
    %376 = vmatprep.subr.mxu0 0.0
    %377 = vmatpush1.msra.mxu0 0.0
    %378 = vmatprep.subr.mxu0 0.0
    %379 = vmatpush1.msra.mxu0 0.0
    %380 = vmatprep.subr.mxu0 0.0
    %381 = vmatpush1.msra.mxu0 0.0
    %382 = vmatprep.subr.mxu0 0.0
    %383 = vmatpush1.msra.mxu0 0.0
    %384 = vmatprep.subr.mxu0 0.0
    %385 = vmatpush1.msra.mxu0 0.0
    %386 = vmatprep.subr.mxu0 0.0
    %387 = vmatpush1.msra.mxu0 0.0
    %388 = vmatprep.subr.mxu0 0.0
    %389 = vmatpush1.msra.mxu0 0.0
    %390 = vmatprep.subr.mxu0 0.0
    %391 = vmatpush1.msra.mxu0 0.0
    %392 = vmatprep.subr.mxu0 0.0
    %393 = vmatpush1.msra.mxu0 0.0
    %394 = vmatprep.subr.mxu0 0.0
    %395 = vmatpush1.msra.mxu0 0.0
    %396 = vmatprep.subr.mxu0 0.0
    %397 = vmatpush1.msra.mxu0 0.0
    %398 = vmatprep.subr.mxu0 0.0
    %399 = vmatpush1.msra.mxu0 0.0
    %400 = vmatprep.mubr.f32.mxu0 0.0
    %401 = vmatmul.mubr.f32.gmra.mrb[0].mxu0 %v331
    %v402 = vpop.f32.mrb[0].mxu0
    %v403 = vadd.f32 0.0, %v402
    %v404 = vpop.f32.mrb[0].mxu0
    %405 = vdwg.mxu0
    %s406 = scalar_lea.vmem [#allocation5], 2
    %407 = vst [vmem:[%s406] sm:$0x3] %v403
    %v408 = vld [vmem:[%s0 + $0x2] sm:$0x1]
    %v409 = vld [vmem:[%s0 + $0x6] sm:$0x1]
    %s410 = scalar_lea.vmem [#allocation2], 16
    %v411 = vld [vmem:[%s410] sm:$0x3f]
    %v414 = vrot.slane %v409, 7
    %v415 = vsel %vm46, %v414, %v408
    %v416 = vsel %vm48, %v415, 0
    %v419 = vsel %vm48, %v411, 0
    %421 = vmatprep.subr.mxu0 0.0
    %422 = vmatpush1.xpose.msra.mxu0 %v419
    %423 = vmatprep.subr.mxu0 0.0
    %424 = vmatpush1.xpose.msra.mxu0 0.0
    %425 = vmatprep.subr.mxu0 0.0
    %426 = vmatpush1.xpose.msra.mxu0 0.0
    %427 = vmatprep.subr.mxu0 0.0
    %428 = vmatpush1.xpose.msra.mxu0 0.0
    %429 = vmatprep.subr.mxu0 0.0
    %430 = vmatpush1.xpose.msra.mxu0 0.0
    %431 = vmatprep.subr.mxu0 0.0
    %432 = vmatpush1.xpose.msra.mxu0 0.0
    %433 = vmatprep.subr.mxu0 0.0
    %434 = vmatpush1.xpose.msra.mxu0 0.0
    %435 = vmatprep.subr.mxu0 0.0
    %436 = vmatpush1.xpose.msra.mxu0 0.0
    %437 = vmatprep.subr.mxu0 0.0
    %438 = vmatpush1.xpose.msra.mxu0 0.0
    %439 = vmatprep.subr.mxu0 0.0
    %440 = vmatpush1.xpose.msra.mxu0 0.0
    %441 = vmatprep.subr.mxu0 0.0
    %442 = vmatpush1.xpose.msra.mxu0 0.0
    %443 = vmatprep.subr.mxu0 0.0
    %444 = vmatpush1.xpose.msra.mxu0 0.0
    %445 = vmatprep.subr.mxu0 0.0
    %446 = vmatpush1.xpose.msra.mxu0 0.0
    %447 = vmatprep.subr.mxu0 0.0
    %448 = vmatpush1.xpose.msra.mxu0 0.0
    %449 = vmatprep.subr.mxu0 0.0
    %450 = vmatpush1.xpose.msra.mxu0 0.0
    %451 = vmatprep.subr.mxu0 0.0
    %452 = vmatpush1.xpose.msra.mxu0 0.0
    %453 = vmatprep.subr.mxu0 0.0
    %454 = vmatpush1.xpose.msra.mxu0 0.0
    %455 = vmatprep.subr.mxu0 0.0
    %456 = vmatpush1.xpose.msra.mxu0 0.0
    %457 = vmatprep.subr.mxu0 0.0
    %458 = vmatpush1.xpose.msra.mxu0 0.0
    %459 = vmatprep.subr.mxu0 0.0
    %460 = vmatpush1.xpose.msra.mxu0 0.0
    %461 = vmatprep.subr.mxu0 0.0
    %462 = vmatpush1.xpose.msra.mxu0 0.0
    %463 = vmatprep.subr.mxu0 0.0
    %464 = vmatpush1.xpose.msra.mxu0 0.0
    %465 = vmatprep.subr.mxu0 0.0
    %466 = vmatpush1.xpose.msra.mxu0 0.0
    %467 = vmatprep.subr.mxu0 0.0
    %468 = vmatpush1.xpose.msra.mxu0 0.0
    %469 = vmatprep.subr.mxu0 0.0
    %470 = vmatpush1.xpose.msra.mxu0 0.0
    %471 = vmatprep.subr.mxu0 0.0
    %472 = vmatpush1.xpose.msra.mxu0 0.0
    %473 = vmatprep.subr.mxu0 0.0
    %474 = vmatpush1.xpose.msra.mxu0 0.0
    %475 = vmatprep.subr.mxu0 0.0
    %476 = vmatpush1.xpose.msra.mxu0 0.0
    %477 = vmatprep.subr.mxu0 0.0
    %478 = vmatpush1.xpose.msra.mxu0 0.0
    %479 = vmatprep.subr.mxu0 0.0
    %480 = vmatpush1.xpose.msra.mxu0 0.0
    %481 = vmatprep.subr.mxu0 0.0
    %482 = vmatpush1.xpose.msra.mxu0 0.0
    %483 = vmatprep.subr.mxu0 0.0
    %484 = vmatpush1.xpose.msra.mxu0 0.0
    %485 = vmatprep.mubr.f32.mxu0 0.0
    %486 = vmatmul.mubr.f32.gmra.mrb[0].mxu0 %v416
    %v487 = vpop.f32.mrb[0].mxu0
    %v488 = vadd.f32 0.0, %v487
    %v489 = vpop.f32.mrb[0].mxu0
    %490 = vdwg.mxu0
    %v491 = vmul.f32 %v488, 2.0
    %v492 = vlaneseq
    %v493 = vshrl.u32 %v492, 7
    %v494 = vsub.s32 2, %v493
    %v495 = vrot.slane %v35, %v494
    %v496 = vsub.f32 %v495, %v491
    %v497 = vsel %vm130, %v496, inf
    %498 = vmin.xlane.f32.xlu0 %v497
    %v499 = vpop.xlane.xlu0 %498
    %vm500 = vcmp.eq.f32.partialorder %v496, %v499
    %v501 = vsel %vm500, %v139, 2.0
    %v502 = vsel %vm130, %v501, inf
    %503 = vmin.xlane.f32.xlu0 %v502
    %v504 = vpop.xlane.xlu0 %503
    %s505 = scalar_lea.vmem %s4, 4
    %v506 = vld [vmem:[%s505] sm:$0x3]
    %vm507 = vcmp.eq.f32.partialorder %v39, %v504
    %v508 = vsel %vm507, 1, 0
    %v509 = vcvt.s32.f32 %v508
    %v511 = vsel %vm149, %v509, 0
    %v514 = vsel %vm153, %v506, 0
    %516 = vmatprep.subr.mxu0 0.0
    %517 = vmatpush1.msra.mxu0 %v514
    %518 = vmatprep.subr.mxu0 0.0
    %519 = vmatpush1.msra.mxu0 0.0
    %520 = vmatprep.subr.mxu0 0.0
    %521 = vmatpush1.msra.mxu0 0.0
    %522 = vmatprep.subr.mxu0 0.0
    %523 = vmatpush1.msra.mxu0 0.0
    %524 = vmatprep.subr.mxu0 0.0
    %525 = vmatpush1.msra.mxu0 0.0
    %526 = vmatprep.subr.mxu0 0.0
    %527 = vmatpush1.msra.mxu0 0.0
    %528 = vmatprep.subr.mxu0 0.0
    %529 = vmatpush1.msra.mxu0 0.0
    %530 = vmatprep.subr.mxu0 0.0
    %531 = vmatpush1.msra.mxu0 0.0
    %532 = vmatprep.subr.mxu0 0.0
    %533 = vmatpush1.msra.mxu0 0.0
    %534 = vmatprep.subr.mxu0 0.0
    %535 = vmatpush1.msra.mxu0 0.0
    %536 = vmatprep.subr.mxu0 0.0
    %537 = vmatpush1.msra.mxu0 0.0
    %538 = vmatprep.subr.mxu0 0.0
    %539 = vmatpush1.msra.mxu0 0.0
    %540 = vmatprep.subr.mxu0 0.0
    %541 = vmatpush1.msra.mxu0 0.0
    %542 = vmatprep.subr.mxu0 0.0
    %543 = vmatpush1.msra.mxu0 0.0
    %544 = vmatprep.subr.mxu0 0.0
    %545 = vmatpush1.msra.mxu0 0.0
    %546 = vmatprep.subr.mxu0 0.0
    %547 = vmatpush1.msra.mxu0 0.0
    %548 = vmatprep.subr.mxu0 0.0
    %549 = vmatpush1.msra.mxu0 0.0
    %550 = vmatprep.subr.mxu0 0.0
    %551 = vmatpush1.msra.mxu0 0.0
    %552 = vmatprep.subr.mxu0 0.0
    %553 = vmatpush1.msra.mxu0 0.0
    %554 = vmatprep.subr.mxu0 0.0
    %555 = vmatpush1.msra.mxu0 0.0
    %556 = vmatprep.subr.mxu0 0.0
    %557 = vmatpush1.msra.mxu0 0.0
    %558 = vmatprep.subr.mxu0 0.0
    %559 = vmatpush1.msra.mxu0 0.0
    %560 = vmatprep.subr.mxu0 0.0
    %561 = vmatpush1.msra.mxu0 0.0
    %562 = vmatprep.subr.mxu0 0.0
    %563 = vmatpush1.msra.mxu0 0.0
    %564 = vmatprep.subr.mxu0 0.0
    %565 = vmatpush1.msra.mxu0 0.0
    %566 = vmatprep.subr.mxu0 0.0
    %567 = vmatpush1.msra.mxu0 0.0
    %568 = vmatprep.subr.mxu0 0.0
    %569 = vmatpush1.msra.mxu0 0.0
    %570 = vmatprep.subr.mxu0 0.0
    %571 = vmatpush1.msra.mxu0 0.0
    %572 = vmatprep.subr.mxu0 0.0
    %573 = vmatpush1.msra.mxu0 0.0
    %574 = vmatprep.subr.mxu0 0.0
    %575 = vmatpush1.msra.mxu0 0.0
    %576 = vmatprep.subr.mxu0 0.0
    %577 = vmatpush1.msra.mxu0 0.0
    %578 = vmatprep.subr.mxu0 0.0
    %579 = vmatpush1.msra.mxu0 0.0
    %580 = vmatprep.mubr.f32.mxu0 0.0
    %581 = vmatmul.mubr.f32.gmra.mrb[0].mxu0 %v511
    %v582 = vpop.f32.mrb[0].mxu0
    %v583 = vadd.f32 0.0, %v582
    %v584 = vpop.f32.mrb[0].mxu0
    %585 = vdwg.mxu0
    %s586 = scalar_lea.vmem [#allocation5], 4
    %587 = vst [vmem:[%s586] sm:$0x3] %v583
    // Predicated region
    $region26: #{tpu_custom_call.1} parent=1 // pred_check
      _
    $region27: #{tpu_custom_call.1} parent=1 // pred_check_branch
      %589 = sbr.rel (0) target = $region29
    $region28: #{tpu_custom_call.1} parent=1 // pred_region
      %s591 = ssub.s32 96, 96
      %592 = vsyncadd [#allocation4], %s591
      %s593 = sshll.u32 [#allocation5], 4
      %s594 = int_to_ptr.vmem [resolvable:$true] %s593
      %599 = dma.vmem_to_hbm [thread:$0]  %s594, 96, %s5, [#allocation4], 32, 32, 2
    $region29: #{tpu_custom_call.1} parent=1 // pred_fallthru
      _
    // Predicated region
    $region30: #{tpu_custom_call.1} parent=1 // pred_check
      _
    $region31: #{tpu_custom_call.1} parent=1 // pred_check_branch
      %601 = sbr.rel (0) target = $region33
    $region32: #{tpu_custom_call.1} parent=1 // pred_region
      %602 = dma.done [#allocation4], 96
    $region33: #{tpu_custom_call.1} parent=1 // pred_fallthru
      _
    %603 = vsyncpa [#allocation3], 1
    %604 = vsyncpa [#allocation4], 1

</llo_original>
